<compile_context>
chip_gen: v5e
topology: v5e:2x2
jax: 0.10.0
libtpu: 0.0.40
codegen_flags: <defaults>
</compile_context>

<pallas_src>
import functools

import numpy as np
import jax
import jax.numpy as jnp
from jax import lax
from jax.experimental import pallas as pl
from jax.experimental.pallas import tpu as pltpu

EPS = 1e-5
_VMEM_LIMIT = 32 * 1024 * 1024  # explicit scoped-VMEM budget (fits v5e/v6e/v7x)


def _largest_divisor(n, candidates):
    for c in candidates:
        if n % c == 0:
            return c
    return None


def _row_tile(m, c, max_bytes=2 * 1024 * 1024):
    """Largest row tile dividing m with tile*c*4 bytes <= max_bytes."""
    cap = max(8, max_bytes // max(1, 4 * c))
    for t in (1024, 512, 256, 128, 64, 32, 16, 8):
        if t <= cap and m % t == 0:
            return t
    return m  # small / ragged M: single full-dim block


# --------------------------------------------------------------------------
# Tiled matmul (+ bias) kernel : used for 1x1 convs and the FC head
# --------------------------------------------------------------------------

def _matmul_bias_kernel(a_ref, b_ref, bias_ref, o_ref, acc_ref):
    k = pl.program_id(2)

    @pl.when(k == 0)
    def _():
        acc_ref[...] = jnp.zeros_like(acc_ref)

    acc_ref[...] += jnp.dot(a_ref[...].astype(jnp.bfloat16), b_ref[...],
                            preferred_element_type=jnp.float32)

    @pl.when(k == pl.num_programs(2) - 1)
    def _():
        o_ref[...] = (acc_ref[...] + bias_ref[...]).astype(o_ref.dtype)


def matmul_bias(a, b, bias):
    """(M,K) fp32 @ (K,N) bf16 + bias[N] -> (M,N) fp32, fp32 MXU accumulation."""
    M, K = a.shape
    K2, N = b.shape
    assert K == K2
    # All dims in this network divide cleanly; ragged dims fall back to a
    # single full-dim block (no host-side zero padding of activations).
    tm = _largest_divisor(M, (256, 128, 64, 32, 16, 8)) or M
    tk = _largest_divisor(K, (512, 256, 128)) or K
    tn = _largest_divisor(N, (256, 128)) or N
    bias2 = bias.reshape(1, N).astype(jnp.float32)
    return pl.pallas_call(
        _matmul_bias_kernel,
        out_shape=jax.ShapeDtypeStruct((M, N), jnp.float32),
        grid_spec=pltpu.PrefetchScalarGridSpec(
            num_scalar_prefetch=0,
            grid=(M // tm, N // tn, K // tk),
            in_specs=[pl.BlockSpec((tm, tk), lambda i, j, k: (i, k)),
                      pl.BlockSpec((tk, tn), lambda i, j, k: (k, j)),
                      pl.BlockSpec((1, tn), lambda i, j, k: (0, j))],
            out_specs=pl.BlockSpec((tm, tn), lambda i, j, k: (i, j)),
            scratch_shapes=[pltpu.VMEM((tm, tn), jnp.float32)]),
        compiler_params=pltpu.CompilerParams(
            dimension_semantics=("parallel", "parallel", "arbitrary"),
            vmem_limit_bytes=_VMEM_LIMIT),
    )(a, b, bias2)


# --------------------------------------------------------------------------
# Direct spatial conv kernel (3x3 / 7x7): tap axis in the grid, in-VMEM gather
# --------------------------------------------------------------------------

def _conv_tap_kernel(offs_ref, x_ref, w_ref, b_ref, o_ref, acc_ref, patch_ref,
                     *, ho, wo):
    t = pl.program_id(1)

    @pl.when(t == 0)
    def _():
        acc_ref[...] = jnp.zeros_like(acc_ref)

    oy = offs_ref[t, 1]
    ox = offs_ref[t, 2]

    def gather_row(y, carry):
        row = x_ref[0, oy + y, pl.ds(ox, wo), :]
        patch_ref[pl.ds(y * wo, wo), :] = row.astype(patch_ref.dtype)
        return carry

    lax.fori_loop(0, ho, gather_row, 0)

    acc_ref[...] += jnp.dot(patch_ref[...], w_ref[0],
                            preferred_element_type=jnp.float32)

    @pl.when(t == pl.num_programs(1) - 1)
    def _():
        o_ref[0] = (acc_ref[...] + b_ref[...]).astype(o_ref.dtype)


def conv_spatial(x, w, b, stride, padding):
    """Direct conv: accumulate kh*kw taps in-kernel.  x NHWC, w (kh,kw,Cin,Cout)."""
    N, H, W, Cin = x.shape
    kh, kw, _, Cout = w.shape
    assert stride in (1, 2)
    Ho = (H + 2 * padding - kh) // stride + 1
    Wo = (W + 2 * padding - kw) // stride + 1
    xp = jnp.pad(x, ((0, 0), (padding, padding), (padding, padding), (0, 0)))
    Hp, Wp = H + 2 * padding, W + 2 * padding

    if stride == 1:
        P = 1
        Hh, Wh = Hp, Wp
        xph = xp                                          # (N, Hp, Wp, Cin)
        taps = [(0, dy, dx) for dy in range(kh) for dx in range(kw)]
    else:
        # Split the padded input into its 4 stride-2 phase planes so every
        # in-kernel tap gather is a unit-stride slice.
        if Hp % 2:
            xp = jnp.pad(xp, ((0, 0), (0, 1), (0, 0), (0, 0)))
            Hp += 1
        if Wp % 2:
            xp = jnp.pad(xp, ((0, 0), (0, 0), (0, 1), (0, 0)))
            Wp += 1
        P = 4
        Hh, Wh = Hp // 2, Wp // 2
        planes = [xp[:, a::2, b::2, :] for a in (0, 1) for b in (0, 1)]
        xph = jnp.stack(planes, axis=1).reshape(N * P, Hh, Wh, Cin)
        taps = [((dy % 2) * 2 + (dx % 2), dy // 2, dx // 2)
                for dy in range(kh) for dx in range(kw)]

    T = kh * kw
    # Order taps so same-phase taps are consecutive (no redundant input DMA).
    order = sorted(range(T), key=lambda i: taps[i][0])
    offs = jnp.asarray(np.array([taps[i] for i in order], dtype=np.int32))
    wt = (w.reshape(T, Cin, Cout)[np.array(order)]).astype(jnp.bfloat16)
    bias2 = b.reshape(1, Cout).astype(jnp.float32)
    HoWo = Ho * Wo

    out = pl.pallas_call(
        functools.partial(_conv_tap_kernel, ho=Ho, wo=Wo),
        out_shape=jax.ShapeDtypeStruct((N, HoWo, Cout), jnp.float32),
        grid_spec=pltpu.PrefetchScalarGridSpec(
            num_scalar_prefetch=1,
            grid=(N, T),
            in_specs=[
                pl.BlockSpec((1, Hh, Wh, Cin),
                             lambda n, t, offs: (n * P + offs[t, 0], 0, 0, 0)),
                pl.BlockSpec((1, Cin, Cout), lambda n, t, offs: (t, 0, 0)),
                pl.BlockSpec((1, Cout), lambda n, t, offs: (0, 0)),
            ],
            out_specs=pl.BlockSpec((1, HoWo, Cout),
                                   lambda n, t, offs: (n, 0, 0)),
            scratch_shapes=[pltpu.VMEM((HoWo, Cout), jnp.float32),
                            pltpu.VMEM((HoWo, Cin), jnp.bfloat16)]),
        compiler_params=pltpu.CompilerParams(
            dimension_semantics=("parallel", "arbitrary"),
            vmem_limit_bytes=_VMEM_LIMIT),
    )(offs, xph, wt, bias2)
    return out.reshape(N, Ho, Wo, Cout)


def conv1x1(x, w, b, stride):
    N, H, W, Cin = x.shape
    Cout = w.shape[-1]
    if stride != 1:
        # TODO(synk): stride-2 subsample of the 1x1 shortcut input kept in
        # plain JAX (1/4-size copy).
        x = x[:, ::stride, ::stride, :]
        H, W = x.shape[1], x.shape[2]
    y = matmul_bias(x.reshape(N * H * W, Cin),
                    w.reshape(Cin, Cout).astype(jnp.bfloat16), b)
    return y.reshape(N, H, W, Cout)


def conv2d(x, w, b, stride, padding):
    kh, kw = w.shape[0], w.shape[1]
    if kh == 1 and kw == 1 and padding == 0:
        return conv1x1(x, w, b, stride)
    return conv_spatial(x, w, b, stride, padding)


# --------------------------------------------------------------------------
# BatchNorm (training mode, batch stats) : one-pass stats + fused affine/ReLU
# --------------------------------------------------------------------------

def _bn_stats_kernel(x_ref, sum_ref, ssq_ref):
    @pl.when(pl.program_id(0) == 0)
    def _():
        sum_ref[...] = jnp.zeros_like(sum_ref)
        ssq_ref[...] = jnp.zeros_like(ssq_ref)

    x = x_ref[...]
    sum_ref[...] += jnp.sum(x, axis=0, keepdims=True)
    ssq_ref[...] += jnp.sum(x * x, axis=0, keepdims=True)


def bn_batch_stats(x2):
    """Single pass per-channel (sum, sum of squares) over a (M, C) matrix."""
    M, C = x2.shape
    tm = _row_tile(M, C)
    s, q = pl.pallas_call(
        _bn_stats_kernel,
        out_shape=(jax.ShapeDtypeStruct((1, C), jnp.float32),
                   jax.ShapeDtypeStruct((1, C), jnp.float32)),
        grid_spec=pltpu.PrefetchScalarGridSpec(
            num_scalar_prefetch=0,
            grid=(M // tm,),
            in_specs=[pl.BlockSpec((tm, C), lambda i: (i, 0))],
            out_specs=[pl.BlockSpec((1, C), lambda i: (0, 0)),
                       pl.BlockSpec((1, C), lambda i: (0, 0))]),
        compiler_params=pltpu.CompilerParams(
            dimension_semantics=("arbitrary",),
            vmem_limit_bytes=_VMEM_LIMIT),
    )(x2)
    return s[0], q[0]


def _ss_kernel(x_ref, s_ref, t_ref, o_ref, *, relu):
    y = x_ref[...] * s_ref[...] + t_ref[...]
    if relu:
        y = jnp.maximum(y, 0.0)
    o_ref[...] = y


def _ss_res_kernel(x_ref, s_ref, t_ref, r_ref, o_ref, *, relu):
    y = x_ref[...] * s_ref[...] + t_ref[...] + r_ref[...]
    if relu:
        y = jnp.maximum(y, 0.0)
    o_ref[...] = y


def scale_shift_act(x2, scale, shift, residual=None, relu=True):
    """Row-tiled fused y = [relu]( x*scale + shift [+ residual] ) on (M, C)."""
    M, C = x2.shape
    tm = _row_tile(M, C)
    row_spec = pl.BlockSpec((tm, C), lambda i: (i, 0))
    vec_spec = pl.BlockSpec((1, C), lambda i: (0, 0))
    s2 = scale.reshape(1, C).astype(jnp.float32)
    t2 = shift.reshape(1, C).astype(jnp.float32)
    if residual is None:
        kern = functools.partial(_ss_kernel, relu=relu)
        in_specs = [row_spec, vec_spec, vec_spec]
        args = (x2, s2, t2)
    else:
        kern = functools.partial(_ss_res_kernel, relu=relu)
        in_specs = [row_spec, vec_spec, vec_spec, row_spec]
        args = (x2, s2, t2, residual)
    return pl.pallas_call(
        kern,
        out_shape=jax.ShapeDtypeStruct((M, C), jnp.float32),
        grid_spec=pltpu.PrefetchScalarGridSpec(
            num_scalar_prefetch=0,
            grid=(M // tm,),
            in_specs=in_specs,
            out_specs=row_spec),
        compiler_params=pltpu.CompilerParams(
            dimension_semantics=("parallel",),
            vmem_limit_bytes=_VMEM_LIMIT),
    )(*args)


def batchnorm_act(x, gamma, beta, residual=None, relu=True):
    """Training-mode BatchNorm (batch stats, biased var) + residual + ReLU."""
    shp = x.shape
    C = shp[-1]
    x2 = x.reshape(-1, C)
    M = x2.shape[0]
    s, q = bn_batch_stats(x2)
    mean = s / M
    var = jnp.maximum(q / M - mean * mean, 0.0)
    # TODO(synk): per-channel scale/shift math (C elements) stays in plain JAX.
    scale = gamma * lax.rsqrt(var + EPS)
    shift = beta - mean * scale
    res2 = residual.reshape(-1, C) if residual is not None else None
    y2 = scale_shift_act(x2, scale, shift, res2, relu)
    return y2.reshape(shp)


# --------------------------------------------------------------------------
# MaxPool 3x3 / stride 2 / pad 1 over 2x2 phase planes
# --------------------------------------------------------------------------

def _maxpool_kernel(ph_ref, o_ref, *, ho, wo):
    # ph_ref holds the 4 stride-2 phase planes of the (-inf padded) input.
    def tap(p, dy, dx):
        return ph_ref[p, dy:dy + ho, dx:dx + wo, :]

    m = tap(0, 0, 0)
    for (p, dy, dx) in ((1, 0, 0), (0, 0, 1), (2, 0, 0), (3, 0, 0), (2, 0, 1),
                        (0, 1, 0), (1, 1, 0), (0, 1, 1)):
        m = jnp.maximum(m, tap(p, dy, dx))
    o_ref[0] = m


def maxpool2d_3x3_s2_p1(x):
    """MaxPool2d(kernel=3, stride=2, padding=1) on NHWC (even H, W)."""
    N, H, W, C = x.shape
    Ho, Wo = H // 2, W // 2
    xp = jnp.pad(x, ((0, 0), (1, 1), (1, 1), (0, 0)),
                 constant_values=-jnp.inf)
    Hh, Wh = (H + 2) // 2, (W + 2) // 2
    planes = [xp[:, a::2, b::2, :] for a in (0, 1) for b in (0, 1)]
    xph = jnp.stack(planes, axis=1).reshape(N * 4, Hh, Wh, C)
    return pl.pallas_call(
        functools.partial(_maxpool_kernel, ho=Ho, wo=Wo),
        out_shape=jax.ShapeDtypeStruct((N, Ho, Wo, C), jnp.float32),
        grid_spec=pltpu.PrefetchScalarGridSpec(
            num_scalar_prefetch=0,
            grid=(N,),
            in_specs=[pl.BlockSpec((4, Hh, Wh, C), lambda n: (n, 0, 0, 0))],
            out_specs=pl.BlockSpec((1, Ho, Wo, C), lambda n: (n, 0, 0, 0))),
        compiler_params=pltpu.CompilerParams(
            dimension_semantics=("parallel",),
            vmem_limit_bytes=_VMEM_LIMIT),
    )(xph)


# --------------------------------------------------------------------------
# Parameter initialization / configuration (plain JAX glue)
# --------------------------------------------------------------------------

def init_conv(key, k, cin, cout):
    fan_in = k * k * cin
    w = jax.random.normal(key, (k, k, cin, cout), jnp.float32) / np.sqrt(fan_in)
    return {'w': w.astype(jnp.float32), 'b': jnp.zeros((cout,), jnp.float32)}


def init_bn(c):
    return {'gamma': jnp.ones((c,), jnp.float32),
            'beta': jnp.zeros((c,), jnp.float32)}


def init_linear(key, fin, fout):
    w = jax.random.normal(key, (fin, fout), jnp.float32) / np.sqrt(fin)
    return {'w': w.astype(jnp.float32), 'b': jnp.zeros((fout,), jnp.float32)}


def init_basic(nk, in_c, outs, ks):
    return {
        'conv1': init_conv(nk(), ks[0], in_c, outs[0]), 'bn1': init_bn(outs[0]),
        'conv2': init_conv(nk(), ks[1], outs[0], outs[1]), 'bn2': init_bn(outs[1]),
        'conv3': init_conv(nk(), ks[2], outs[1], outs[2]), 'bn3': init_bn(outs[2]),
    }


def init_down(nk, in_c, outs, ks):
    p = init_basic(nk, in_c, outs, ks)
    p['extra_conv'] = init_conv(nk(), 1, in_c, outs[2])
    p['extra_bn'] = init_bn(outs[2])
    return p


def make_layer_cfgs():
    def down(in_c, outs, ks, st, pd):
        return dict(type='down', in_c=in_c, outs=outs, ks=ks, st=st, pd=pd)

    def basic(in_c, outs, ks, st, pd):
        return dict(type='basic', in_c=in_c, outs=outs, ks=ks, st=st, pd=pd)

    return [
        [down(64, [64, 64, 256], [1, 3, 1], [1, 1, 1, 1], [0, 1, 0]),
         basic(256, [64, 64, 256], [1, 3, 1], [1, 1, 1, 1], [0, 1, 0]),
         basic(256, [64, 64, 256], [1, 3, 1], [1, 1, 1, 1], [0, 1, 0])],
        [down(256, [128, 128, 512], [1, 3, 1], [1, 2, 1, 2], [0, 1, 0]),
         basic(512, [128, 128, 512], [1, 3, 1], [1, 1, 1, 1], [0, 1, 0]),
         basic(512, [128, 128, 512], [1, 3, 1], [1, 1, 1, 1], [0, 1, 0]),
         down(512, [128, 128, 512], [1, 3, 1], [1, 1, 1, 1], [0, 1, 0])],
        [down(512, [256, 256, 1024], [1, 3, 1], [1, 2, 1, 2], [0, 1, 0]),
         basic(1024, [256, 256, 1024], [1, 3, 1], [1, 1, 1, 1], [0, 1, 0]),
         basic(1024, [256, 256, 1024], [1, 3, 1], [1, 1, 1, 1], [0, 1, 0]),
         down(1024, [256, 256, 1024], [1, 3, 1], [1, 1, 1, 1], [0, 1, 0]),
         down(1024, [256, 256, 1024], [1, 3, 1], [1, 1, 1, 1], [0, 1, 0]),
         down(1024, [256, 256, 1024], [1, 3, 1], [1, 1, 1, 1], [0, 1, 0])],
        [down(1024, [512, 512, 2048], [1, 3, 1], [1, 2, 1, 2], [0, 1, 0]),
         down(2048, [512, 512, 2048], [1, 3, 1], [1, 1, 1, 1], [0, 1, 0]),
         down(2048, [512, 512, 2048], [1, 3, 1], [1, 1, 1, 1], [0, 1, 0])],
    ]


def init_resnet50(key, start_channels):
    keys = iter(jax.random.split(key, 128))
    nk = lambda: next(keys)
    params = {'conv1': init_conv(nk(), 7, start_channels, 64)}
    cfgs = make_layer_cfgs()
    layers = []
    for layer in cfgs:
        blocks = []
        for c in layer:
            if c['type'] == 'down':
                blocks.append(init_down(nk, c['in_c'], c['outs'], c['ks']))
            else:
                blocks.append(init_basic(nk, c['in_c'], c['outs'], c['ks']))
        layers.append(blocks)
    params['layers'] = layers
    params['fc1'] = init_linear(nk(), 2048, 1024)
    params['bn_fc'] = init_bn(1024)
    params['fc2'] = init_linear(nk(), 1024, 1024)
    return params, cfgs


# --------------------------------------------------------------------------
# Block / model forward
# --------------------------------------------------------------------------

def basic_forward(p, cfg, x):
    s, pd = cfg['st'][0], cfg['pd']
    out = conv2d(x, p['conv1']['w'], p['conv1']['b'], s, pd[0])
    out = batchnorm_act(out, p['bn1']['gamma'], p['bn1']['beta'], relu=True)
    out = conv2d(out, p['conv2']['w'], p['conv2']['b'], s, pd[1])
    out = batchnorm_act(out, p['bn2']['gamma'], p['bn2']['beta'], relu=True)
    out = conv2d(out, p['conv3']['w'], p['conv3']['b'], s, pd[2])
    return batchnorm_act(out, p['bn3']['gamma'], p['bn3']['beta'],
                         residual=x, relu=True)


def down_forward(p, cfg, x):
    st, pd = cfg['st'], cfg['pd']
    sc = conv2d(x, p['extra_conv']['w'], p['extra_conv']['b'], st[3], 0)
    sc = batchnorm_act(sc, p['extra_bn']['gamma'], p['extra_bn']['beta'],
                       relu=False)
    out = conv2d(x, p['conv1']['w'], p['conv1']['b'], st[0], pd[0])
    out = batchnorm_act(out, p['bn1']['gamma'], p['bn1']['beta'], relu=True)
    out = conv2d(out, p['conv2']['w'], p['conv2']['b'], st[1], pd[1])
    out = batchnorm_act(out, p['bn2']['gamma'], p['bn2']['beta'], relu=True)
    out = conv2d(out, p['conv3']['w'], p['conv3']['b'], st[2], pd[2])
    return batchnorm_act(out, p['bn3']['gamma'], p['bn3']['beta'],
                         residual=sc, relu=True)


def resnet50_forward(params, cfgs, x_nchw):
    x = jnp.transpose(x_nchw, (0, 2, 3, 1)).astype(jnp.float32)  # NCHW -> NHWC
    out = conv2d(x, params['conv1']['w'], params['conv1']['b'], 2, 3)
    out = maxpool2d_3x3_s2_p1(out)
    for layer_p, layer_c in zip(params['layers'], cfgs):
        for p, c in zip(layer_p, layer_c):
            out = (down_forward(p, c, out) if c['type'] == 'down'
                   else basic_forward(p, c, out))
    # adaptive_avg_pool2d(out, 1) + squeeze -> (N, 2048)
    # TODO(synk): final spatial mean kept in plain JAX (spatial is 1x1 here).
    feat = jnp.mean(out, axis=(1, 2))

    # latent head: Linear -> BatchNorm1d -> ReLU -> Linear
    z = matmul_bias(feat, params['fc1']['w'].astype(jnp.bfloat16),
                    params['fc1']['b'])
    z = batchnorm_act(z, params['bn_fc']['gamma'], params['bn_fc']['beta'],
                      residual=None, relu=True)
    z = matmul_bias(z, params['fc2']['w'].astype(jnp.bfloat16),
                    params['fc2']['b'])
    return z


if __name__ == "__main__":
    key = jax.random.PRNGKey(0)
    pk, xk = jax.random.split(key)
    start_channels = 3
    params, cfgs = init_resnet50(pk, start_channels)

    # NCHW input (PyTorch convention); 32x32 keeps every stage's spatial size
    # >= 1 through the 5 stride-2 reductions.
    x = jax.random.normal(xk, (2, start_channels, 32, 32), jnp.float32)

    out = resnet50_forward(params, cfgs, x)
    out = jax.block_until_ready(out)
    assert out.shape == (2, 1024), out.shape
    assert bool(jnp.all(jnp.isfinite(out)))
    print("KERNEL_OK")
</pallas_src>

<mosaic_0001>
module attributes {stable_mosaic.version = 11 : i64} {
  func.func @_conv_tap_kernel(%arg0: i32, %arg1: i32, %arg2: memref<49x3xi32, #tpu.memory_space<smem>>, %arg3: memref<1x19x19x3xf32, #tpu.memory_space<vmem>>, %arg4: memref<1x3x64xbf16, #tpu.memory_space<vmem>>, %arg5: memref<1x64xf32, #tpu.memory_space<vmem>>, %arg6: memref<1x256x64xf32, #tpu.memory_space<vmem>>, %arg7: memref<256x64xf32, #tpu.memory_space<vmem>>, %arg8: memref<256x3xbf16, #tpu.memory_space<vmem>>) attributes {dimension_semantics = [#tpu.dimension_semantics<parallel>, #tpu.dimension_semantics<arbitrary>], iteration_bounds = array<i64: 2, 49>, scalar_prefetch = 1 : i64, scratch_operands = 2 : i64, tpu.core_type = #tpu.core_type<tc>, window_params = [{transform_indices = @transform_0, window_bounds = array<i64: 1, 19, 19, 3>}, {transform_indices = @transform_1, window_bounds = array<i64: 1, 3, 64>}, {pipeline_mode = #tpu.pipeline_mode<synchronous>, transform_indices = @transform_2, window_bounds = array<i64: 1, 64>}, {transform_indices = @transform_3, window_bounds = array<i64: 1, 256, 64>}]} {
    %c0_i32 = arith.constant 0 : i32
    %0 = arith.cmpi eq, %arg1, %c0_i32 : i32
    %1 = arith.extui %0 : i1 to i32
    %c0_i32_0 = arith.constant 0 : i32
    %2 = arith.cmpi ne, %1, %c0_i32_0 : i32
    scf.if %2 {
      %cst_12 = arith.constant 0.000000e+00 : f32
      %18 = vector.broadcast %cst_12 : f32 to vector<256x64xf32>
      %c0_13 = arith.constant 0 : index
      %c0_14 = arith.constant 0 : index
      %19 = vector.load %arg7[%c0_13, %c0_14] : memref<256x64xf32, #tpu.memory_space<vmem>>, vector<256x64xf32>
      tpu.vector_store %arg7[%c0_13, %c0_14], %18 {strides = array<i32>} : memref<256x64xf32, #tpu.memory_space<vmem>>, vector<256x64xf32>,
    } else {
    }
    %3 = arith.index_cast %arg1 : i32 to index
    %c1 = arith.constant 1 : index
    %4 = memref.load %arg2[%3, %c1] : memref<49x3xi32, #tpu.memory_space<smem>>
    %5 = arith.index_cast %arg1 : i32 to index
    %c2 = arith.constant 2 : index
    %6 = memref.load %arg2[%5, %c2] : memref<49x3xi32, #tpu.memory_space<smem>>
    %c0_i32_1 = arith.constant 0 : i32
    %c16_i32 = arith.constant 16 : i32
    %7 = arith.addi %c0_i32_1, %c16_i32 : i32
    %c1_i32 = arith.constant 1 : i32
    scf.for %arg9 = %c0_i32_1 to %7 step %c1_i32  : i32 {
      %18 = arith.addi %4, %arg9 : i32
      %c0_12 = arith.constant 0 : index
      %19 = arith.index_cast %18 : i32 to index
      %20 = arith.index_cast %6 : i32 to index
      %c0_13 = arith.constant 0 : index
      %21 = vector.load %arg3[%c0_12, %19, %20, %c0_13] : memref<1x19x19x3xf32, #tpu.memory_space<vmem>>, vector<1x1x16x3xf32>
      %22 = vector.shape_cast %21 : vector<1x1x16x3xf32> to vector<16x3xf32>
      %23 = arith.truncf %22 : vector<16x3xf32> to vector<16x3xbf16>
      %c16_i32_14 = arith.constant 16 : i32
      %24 = arith.muli %arg9, %c16_i32_14 : i32
      %25 = arith.index_cast %24 : i32 to index
      %c0_15 = arith.constant 0 : index
      %26 = vector.load %arg8[%25, %c0_15] : memref<256x3xbf16, #tpu.memory_space<vmem>>, vector<16x3xbf16>
      tpu.vector_store %arg8[%25, %c0_15], %23 {strides = array<i32>} : memref<256x3xbf16, #tpu.memory_space<vmem>>, vector<16x3xbf16>,
    }
    %c16_i32_2 = arith.constant 16 : i32
    %c0 = arith.constant 0 : index
    %c0_3 = arith.constant 0 : index
    %8 = vector.load %arg7[%c0, %c0_3] : memref<256x64xf32, #tpu.memory_space<vmem>>, vector<256x64xf32>
    %c0_4 = arith.constant 0 : index
    %c0_5 = arith.constant 0 : index
    %9 = vector.load %arg8[%c0_4, %c0_5] : memref<256x3xbf16, #tpu.memory_space<vmem>>, vector<256x3xbf16>
    %c0_6 = arith.constant 0 : index
    %c0_7 = arith.constant 0 : index
    %c0_8 = arith.constant 0 : index
    %10 = vector.load %arg4[%c0_6, %c0_7, %c0_8] : memref<1x3x64xbf16, #tpu.memory_space<vmem>>, vector<1x3x64xbf16>
    %11 = vector.shape_cast %10 : vector<1x3x64xbf16> to vector<3x64xbf16>
    %cst = arith.constant dense<0.000000e+00> : vector<256x64xf32>
    %12 = tpu.matmul %9, %11, %cst {dimension_numbers = #tpu.dot_dimension_numbers<[1], [0], [0], [1], [0, 0, 1, 1], [], []>} : vector<256x3xbf16>, vector<3x64xbf16>, vector<256x64xf32> -> vector<256x64xf32>
    %13 = arith.addf %8, %12 : vector<256x64xf32>
    %c0_9 = arith.constant 0 : index
    %c0_10 = arith.constant 0 : index
    %14 = vector.load %arg7[%c0_9, %c0_10] : memref<256x64xf32, #tpu.memory_space<vmem>>, vector<256x64xf32>
    tpu.vector_store %arg7[%c0_9, %c0_10], %13 {strides = array<i32>} : memref<256x64xf32, #tpu.memory_space<vmem>>, vector<256x64xf32>,
    %c48_i32 = arith.constant 48 : i32
    %15 = arith.cmpi eq, %arg1, %c48_i32 : i32
    %16 = arith.extui %15 : i1 to i32
    %c0_i32_11 = arith.constant 0 : i32
    %17 = arith.cmpi ne, %16, %c0_i32_11 : i32
    scf.if %17 {
      %c0_12 = arith.constant 0 : index
      %c0_13 = arith.constant 0 : index
      %18 = vector.load %arg7[%c0_12, %c0_13] : memref<256x64xf32, #tpu.memory_space<vmem>>, vector<256x64xf32>
      %c0_14 = arith.constant 0 : index
      %c0_15 = arith.constant 0 : index
      %19 = vector.load %arg5[%c0_14, %c0_15] : memref<1x64xf32, #tpu.memory_space<vmem>>, vector<1x64xf32>
      %20 = vector.broadcast %19 : vector<1x64xf32> to vector<256x64xf32>
      %21 = arith.addf %18, %20 : vector<256x64xf32>
      %c0_16 = arith.constant 0 : index
      %c0_17 = arith.constant 0 : index
      %c0_18 = arith.constant 0 : index
      %22 = vector.load %arg6[%c0_16, %c0_17, %c0_18] : memref<1x256x64xf32, #tpu.memory_space<vmem>>, vector<1x256x64xf32>
      %23 = vector.shape_cast %22 : vector<1x256x64xf32> to vector<256x64xf32>
      %24 = vector.shape_cast %21 : vector<256x64xf32> to vector<1x256x64xf32>
      tpu.vector_store %arg6[%c0_16, %c0_17, %c0_18], %24 {strides = array<i32>} : memref<1x256x64xf32, #tpu.memory_space<vmem>>, vector<1x256x64xf32>,
    } else {
    }
    return
  }
  func.func @transform_0(%arg0: i32, %arg1: i32, %arg2: memref<49x3xi32, #tpu.memory_space<smem>>) -> (i32, i32, i32, i32) {
    %c4_i32 = arith.constant 4 : i32
    %0 = arith.muli %arg0, %c4_i32 : i32
    %1 = arith.index_cast %arg1 : i32 to index
    %c0 = arith.constant 0 : index
    %2 = memref.load %arg2[%1, %c0] : memref<49x3xi32, #tpu.memory_space<smem>>
    %3 = arith.addi %0, %2 : i32
    %c0_i32 = arith.constant 0 : i32
    %c0_i32_0 = arith.constant 0 : i32
    %c0_i32_1 = arith.constant 0 : i32
    %c0_i32_2 = arith.constant 0 : i32
    return %3, %c0_i32, %c0_i32_0, %c0_i32_1 : i32, i32, i32, i32
  }
  func.func @transform_1(%arg0: i32, %arg1: i32, %arg2: memref<49x3xi32, #tpu.memory_space<smem>>) -> (i32, i32, i32) {
    %c0_i32 = arith.constant 0 : i32
    %c0_i32_0 = arith.constant 0 : i32
    %c0_i32_1 = arith.constant 0 : i32
    return %arg1, %c0_i32, %c0_i32_0 : i32, i32, i32
  }
  func.func @transform_2(%arg0: i32, %arg1: i32, %arg2: memref<49x3xi32, #tpu.memory_space<smem>>) -> (i32, i32) {
    %c0_i32 = arith.constant 0 : i32
    %c0_i32_0 = arith.constant 0 : i32
    %c0_i32_1 = arith.constant 0 : i32
    return %c0_i32, %c0_i32_0 : i32, i32
  }
  func.func @transform_3(%arg0: i32, %arg1: i32, %arg2: memref<49x3xi32, #tpu.memory_space<smem>>) -> (i32, i32, i32) {
    %c0_i32 = arith.constant 0 : i32
    %c0_i32_0 = arith.constant 0 : i32
    %c0_i32_1 = arith.constant 0 : i32
    return %arg0, %c0_i32, %c0_i32_0 : i32, i32, i32
  }
}

</mosaic_0001>

<llo_original>
// kernel: tpu_custom_call.1
$region0: #{tpu_custom_call.1}
  #allocation0 [shape = 'u32[]', space=smem, size = 0x4, offset = 0x4, fixed_abs, tag = 'smem constant byte address 0x4 - core index']
  #allocation1 [shape = 'u32[72,128]{1,0:T(1,128)}', space=vmem, size = 0x9000, scoped, tag = 'internal scratch']
  #allocation2 [shape = 'f32[256,64]{1,0:T(8,128)}', space=vmem, size = 0x20000, scoped, tag = 'scratch operand']
  #allocation3 [shape = 'bf16[256,3]{1,0:T(8,128)(2,1)}', space=vmem, size = 0x10000, scoped, tag = 'scratch operand']
  #allocation4 [shape = 's32[1]{0}', space=sflag, size = 0x4, scoped, tag = 'scoped memory for tpu_custom_call.1']
  #allocation5 [shape = 'u8[28672]{0}', space=smem, size = 0x7000, scoped, tag = 'prefetched SMEM operand 0']
  %s0 = inlined_call_operand.vmem [shape: s32[49,3], index: 0, kind: input, shape index: {}]
  %s1 = inlined_call_operand.vmem [shape: f32[8,19,19,3], index: 1, kind: input, shape index: {}]
  %s2 = inlined_call_operand.vmem [shape: bf16[49,3,64], index: 2, kind: input, shape index: {}]
  %s3 = inlined_call_operand.vmem [shape: f32[1,64], index: 3, kind: input, shape index: {}]
  %s4 = inlined_call_operand.vmem [shape: f32[2,256,64], index: 4, kind: output, shape index: {}]
  %s5 = sld [smem:[#allocation0]]
  $region60: #{tpu_custom_call.1} parent=0
    _
  %s7 = ssub.s32 1, %s5
  %s8 = scalar_select 0, %s7, %s5
  %s10 = sshll.u32 %s0, 4
  %s11 = int_to_ptr.vmem [resolvable:$true] %s10
  %13 = dma.vmem_to_smem %s11, 896, [#allocation5], [#allocation4]
  %15 = dma.done [#allocation4], 896
  %16 = sfence
  loop: start=0, step=1, limit=100
  $region2: #{tpu_custom_call.1} parent=0 // loop_pre_header
    _
  $region3: #{tpu_custom_call.1} parent=0 // loop_header
    %s18 = sphi 0, %s22
    %p19 = scmp.ge.s32.totalorder %s18, 100
    %s25 = sphi 0, %s37
    %s26 = sphi 0, %s33
    %s27 = sphi 0, %s25
    %s28 = sphi 0, %s26
    %s29 = sphi 0, %s27
    %s30 = sphi 0, %s28
    %s48 = sphi 0, %s50
    %s51 = sphi 0, %s48
    %s52 = sphi 0, %s51
    %s68 = sphi 0, %s52
    %s74 = sphi 0, %s76
    %s77 = sphi 0, %s74
    %s78 = sphi 0, %s77
    %s94 = sphi 0, %s78
    %s98 = sphi 0, %s98
    %s100 = sphi 0, %s98
    %s101 = sphi 0, %s100
    %s115 = sphi 0, %s101
    %s121 = sphi 0, %s123
    %s124 = sphi 0, %s121
    %s125 = sphi 0, %s124
    %s141 = sphi 0, %s125
  $region4: #{tpu_custom_call.1} parent=0 // loop_header_branch
    %21 = sbr.rel (%p19) target = $region8
  $region5: #{tpu_custom_call.1} parent=0 // loop_body
    %s23 = ssub.s32 %s18, 1
    %s24 = ssub.s32 %s18, 2
    %s31 = sadd.s32 1, %s26
    %p32 = scmp.ge.s32.totalorder %s31, 49
    %s33 = scalar_select %p32, 0, %s31
    %s34 = sadd.s32 1, %s25
    %s35 = scalar_select %p32, %s34, %s25
    %p36 = scmp.ge.s32.totalorder %s35, 2
    %s37 = scalar_select %p36, 0, %s35
    %s38 = smul.u32 %s25, 4
    %s39 = smul.u32 %s26, 128
    %s40 = sld [smem:[#allocation5 + %s39]]
    %s41 = sadd.s32 %s38, %s40
    %s42 = smul.u32 %s37, 4
    %s43 = smul.u32 %s33, 128
    %s44 = sld [smem:[#allocation5 + %s43]]
    %s45 = sadd.s32 %s42, %s44
    %s46 = ssub.s32 %s41, %s45
    %p47 = scmp.eq.s32.totalorder %s46, 0
    %s49 = sadd.s32 %s48, 1
    %s50 = scalar_select %p47, %s48, %s49
    %p53 = pneg %p47
    %p54 = scmp.eq.s32.totalorder %s18, 97
    %p55 = por %p53, %p54
    %p56 = scmp.ne.s32.totalorder %s48, %s51
    %p57 = scmp.eq.s32.totalorder %s18, 0
    %p58 = por %p56, %p57
    %p59 = scmp.ne.s32.totalorder %s48, %s51
    %p60 = scmp.eq.s32.totalorder %s23, 97
    %p61 = por %p59, %p60
    %p62 = scmp.ne.s32.totalorder %s51, %s52
    %p63 = scmp.eq.s32.totalorder %s23, 0
    %p64 = por %p62, %p63
    %p65 = scmp.ne.s32.totalorder %s51, %s52
    %p66 = scmp.eq.s32.totalorder %s24, 97
    %p67 = por %p65, %p66
    %p69 = scmp.ne.s32.totalorder %s52, %s68
    %p70 = scmp.eq.s32.totalorder %s24, 0
    %p71 = por %p69, %p70
    %s72 = ssub.s32 %s26, %s33
    %p73 = scmp.eq.s32.totalorder %s72, 0
    %s75 = sadd.s32 %s74, 1
    %s76 = scalar_select %p73, %s74, %s75
    %p79 = pneg %p73
    %p80 = scmp.eq.s32.totalorder %s18, 97
    %p81 = por %p79, %p80
    %p82 = scmp.ne.s32.totalorder %s74, %s77
    %p83 = scmp.eq.s32.totalorder %s18, 0
    %p84 = por %p82, %p83
    %p85 = scmp.ne.s32.totalorder %s74, %s77
    %p86 = scmp.eq.s32.totalorder %s23, 97
    %p87 = por %p85, %p86
    %p88 = scmp.ne.s32.totalorder %s77, %s78
    %p89 = scmp.eq.s32.totalorder %s23, 0
    %p90 = por %p88, %p89
    %p91 = scmp.ne.s32.totalorder %s77, %s78
    %p92 = scmp.eq.s32.totalorder %s24, 97
    %p93 = por %p91, %p92
    %p95 = scmp.ne.s32.totalorder %s78, %s94
    %p96 = scmp.eq.s32.totalorder %s24, 0
    %p97 = por %p95, %p96
    %s99 = sadd.s32 %s98, 1
    %p102 = scmp.eq.s32.totalorder %s18, 97
    %p103 = scmp.ne.s32.totalorder %s98, %s100
    %p104 = scmp.eq.s32.totalorder %s18, 0
    %p105 = por %p103, %p104
    %p106 = scmp.ne.s32.totalorder %s98, %s100
    %p107 = scmp.eq.s32.totalorder %s23, 97
    %p108 = por %p106, %p107
    %p109 = scmp.ne.s32.totalorder %s100, %s101
    %p110 = scmp.eq.s32.totalorder %s23, 0
    %p111 = por %p109, %p110
    %p112 = scmp.ne.s32.totalorder %s100, %s101
    %p113 = scmp.eq.s32.totalorder %s24, 97
    %p114 = por %p112, %p113
    %p116 = scmp.ne.s32.totalorder %s101, %s115
    %p117 = scmp.eq.s32.totalorder %s24, 0
    %p118 = por %p116, %p117
    %s119 = ssub.s32 %s25, %s37
    %p120 = scmp.eq.s32.totalorder %s119, 0
    %s122 = sadd.s32 %s121, 1
    %s123 = scalar_select %p120, %s121, %s122
    %p126 = pneg %p120
    %p127 = scmp.eq.s32.totalorder %s18, 97
    %p128 = por %p126, %p127
    %p129 = scmp.ne.s32.totalorder %s121, %s124
    %p130 = scmp.eq.s32.totalorder %s18, 0
    %p131 = por %p129, %p130
    %p132 = scmp.ne.s32.totalorder %s121, %s124
    %p133 = scmp.eq.s32.totalorder %s23, 97
    %p134 = por %p132, %p133
    %p135 = scmp.ne.s32.totalorder %s124, %s125
    %p136 = scmp.eq.s32.totalorder %s23, 0
    %p137 = por %p135, %p136
    %p138 = scmp.ne.s32.totalorder %s124, %s125
    %p139 = scmp.eq.s32.totalorder %s24, 97
    %p140 = por %p138, %p139
    %p142 = scmp.ne.s32.totalorder %s125, %s141
    %p143 = scmp.eq.s32.totalorder %s24, 0
    %p144 = por %p142, %p143
    %p145 = scmp.le.s32.totalorder 1, %s18
    %p146 = scmp.lt.s32.totalorder %s18, 99
    %p147 = pnand %p145, %p146
    %p148 = pneg %p147
    // Predicated region
    $region9: #{tpu_custom_call.1} parent=5 // pred_check
      _
    $region10: #{tpu_custom_call.1} parent=5 // pred_check_branch
      %150 = sbr.rel (%p147) target = $region12
    $region11: #{tpu_custom_call.1} parent=5 // pred_region
      %s151 = ssub.s32 %s18, 1
      // Predicated region
      $region13: #{tpu_custom_call.1} parent=11 // pred_check
        %p152 = pneg %p111
      $region14: #{tpu_custom_call.1} parent=11 // pred_check_branch
        %154 = sbr.rel (%p152) target = $region16
      $region15: #{tpu_custom_call.1} parent=11 // pred_region
        _
      $region16: #{tpu_custom_call.1} parent=11 // pred_fallthru
        _
    $region12: #{tpu_custom_call.1} parent=5 // pred_fallthru
      _
    %p155 = scmp.lt.s32.totalorder %s18, 98
    // Predicated region
    $region17: #{tpu_custom_call.1} parent=5 // pred_check
      %p156 = pneg %p155
    $region18: #{tpu_custom_call.1} parent=5 // pred_check_branch
      %158 = sbr.rel (%p156) target = $region20
    $region19: #{tpu_custom_call.1} parent=5 // pred_region
      // Predicated region
      $region21: #{tpu_custom_call.1} parent=19 // pred_check
        %p159 = pneg %p58
      $region22: #{tpu_custom_call.1} parent=19 // pred_check_branch
        %161 = sbr.rel (%p159) target = $region24
      $region23: #{tpu_custom_call.1} parent=19 // pred_region
        %s162 = smul.u32 %s25, 4
        %s163 = smul.u32 %s26, 128
        %s164 = sld [smem:[#allocation5 + %s163]]
        %s165 = sadd.s32 %s162, %s164
        %p166 = scmp.lt.s32.totalorder %s165, 7
        %s167 = scalar_select %p166, %s165, 7
        %s168 = smul.addr %s167, 57
        %s169 = smul.addr %s168, 8
        %s170 = scalar_lea.vmem %s1, %s169
        %s171 = smul.u32 %s25, 4
        %s172 = smul.u32 %s26, 128
        %s173 = sld [smem:[#allocation5 + %s172]]
        %s174 = sadd.s32 %s171, %s173
      $region24: #{tpu_custom_call.1} parent=19 // pred_fallthru
        _
      // Predicated region
      $region25: #{tpu_custom_call.1} parent=19 // pred_check
        %p175 = pneg %p84
      $region26: #{tpu_custom_call.1} parent=19 // pred_check_branch
        %177 = sbr.rel (%p175) target = $region28
      $region27: #{tpu_custom_call.1} parent=19 // pred_region
        %p178 = scmp.lt.s32.totalorder %s26, 48
        %s179 = scalar_select %p178, %s26, 48
        %s180 = smul.addr %s179, 2
        %s181 = scalar_lea.vmem %s2, %s180
      $region28: #{tpu_custom_call.1} parent=19 // pred_fallthru
        _
    $region20: #{tpu_custom_call.1} parent=5 // pred_fallthru
      _
    %p182 = scmp.le.s32.totalorder 1, %s18
    %p183 = scmp.lt.s32.totalorder %s18, 99
    %p184 = pnand %p182, %p183
    %p185 = pneg %p184
    // Predicated region
    $region29: #{tpu_custom_call.1} parent=5 // pred_check
      _
    $region30: #{tpu_custom_call.1} parent=5 // pred_check_branch
      %187 = sbr.rel (%p184) target = $region32
    $region31: #{tpu_custom_call.1} parent=5 // pred_region
      %s188 = ssub.s32 %s18, 1
      %s189 = smul.u32 %s27, 4
      %s190 = smul.u32 %s28, 128
      %s191 = sld [smem:[#allocation5 + %s190]]
      %s192 = sadd.s32 %s189, %s191
      %p193 = scmp.lt.s32.totalorder %s192, 7
      %s194 = scalar_select %p193, %s192, 7
      %s195 = smul.addr %s194, 57
      %s196 = smul.addr %s195, 8
      %s197 = scalar_lea.vmem %s1, %s196
      %p198 = pneg %p64
      %p199 = pneg %p61
      %p200 = scmp.lt.s32.totalorder %s28, 48
      %s201 = scalar_select %p200, %s28, 48
      %s202 = smul.addr %s201, 2
      %s203 = scalar_lea.vmem %s2, %s202
      %p204 = pneg %p90
      %p205 = pneg %p87
      %p206 = pneg %p111
      %p207 = pneg %p108
      %p208 = pneg %p137
      %p209 = pneg %p134
      %p210 = scmp.lt.s32.totalorder %s27, 1
      %s211 = scalar_select %p210, %s27, 1
      %s212 = smul.addr %s211, 32
      %s213 = smul.addr %s212, 8
      %s214 = scalar_lea.vmem %s4, %s213
      %s215 = smul.u32 %s27, 4
      %s216 = smul.u32 %s28, 128
      %s217 = sld [smem:[#allocation5 + %s216]]
      %s218 = sadd.s32 %s215, %s217
      %p219 = scmp.lt.s32.totalorder %s218, 7
      %s220 = scalar_select %p219, %s218, 7
      %s221 = smul.addr %s220, 57
      %s222 = smul.addr %s221, 8
      %s223 = scalar_lea.vmem %s1, %s222
      %s224 = smul.u32 %s27, 4
      %s225 = smul.u32 %s28, 128
      %s226 = sld [smem:[#allocation5 + %s225]]
      %s227 = sadd.s32 %s224, %s226
      %p228 = scmp.lt.s32.totalorder %s28, 48
      %s229 = scalar_select %p228, %s28, 48
      %s230 = smul.addr %s229, 2
      %s231 = scalar_lea.vmem %s2, %s230
      %p232 = scmp.lt.s32.totalorder %s27, 1
      %s233 = scalar_select %p232, %s27, 1
      %s234 = smul.addr %s233, 32
      %s235 = smul.addr %s234, 8
      %s236 = scalar_lea.vmem %s4, %s235
      %p238 = scmp.eq.s32.totalorder %s28, 0
      // Predicated region
      $region33: #{tpu_custom_call.1} parent=31 // pred_check
        %p239 = pneg %p238
      $region34: #{tpu_custom_call.1} parent=31 // pred_check_branch
        %241 = sbr.rel (%p239) target = $region36
      $region35: #{tpu_custom_call.1} parent=31 // pred_region
        %vm242 = vcmask 523264
        %243 = vst.msk [vmem:[#allocation2] sm:$0xff] %vm242, 0.0
        %244 = vst.msk [vmem:[#allocation2 + $0x8] sm:$0xff] %vm242, 0.0
        %245 = vst.msk [vmem:[#allocation2 + $0x10] sm:$0xff] %vm242, 0.0
        %246 = vst.msk [vmem:[#allocation2 + $0x18] sm:$0xff] %vm242, 0.0
        %247 = vst.msk [vmem:[#allocation2 + $0x20] sm:$0xff] %vm242, 0.0
        %248 = vst.msk [vmem:[#allocation2 + $0x28] sm:$0xff] %vm242, 0.0
        %249 = vst.msk [vmem:[#allocation2 + $0x30] sm:$0xff] %vm242, 0.0
        %250 = vst.msk [vmem:[#allocation2 + $0x38] sm:$0xff] %vm242, 0.0
        %251 = vst.msk [vmem:[#allocation2 + $0x40] sm:$0xff] %vm242, 0.0
        %252 = vst.msk [vmem:[#allocation2 + $0x48] sm:$0xff] %vm242, 0.0
        %253 = vst.msk [vmem:[#allocation2 + $0x50] sm:$0xff] %vm242, 0.0
        %254 = vst.msk [vmem:[#allocation2 + $0x58] sm:$0xff] %vm242, 0.0
        %255 = vst.msk [vmem:[#allocation2 + $0x60] sm:$0xff] %vm242, 0.0
        %256 = vst.msk [vmem:[#allocation2 + $0x68] sm:$0xff] %vm242, 0.0
        %257 = vst.msk [vmem:[#allocation2 + $0x70] sm:$0xff] %vm242, 0.0
        %258 = vst.msk [vmem:[#allocation2 + $0x78] sm:$0xff] %vm242, 0.0
        %259 = vst.msk [vmem:[#allocation2 + $0x80] sm:$0xff] %vm242, 0.0
        %260 = vst.msk [vmem:[#allocation2 + $0x88] sm:$0xff] %vm242, 0.0
        %261 = vst.msk [vmem:[#allocation2 + $0x90] sm:$0xff] %vm242, 0.0
        %262 = vst.msk [vmem:[#allocation2 + $0x98] sm:$0xff] %vm242, 0.0
        %263 = vst.msk [vmem:[#allocation2 + $0xa0] sm:$0xff] %vm242, 0.0
        %264 = vst.msk [vmem:[#allocation2 + $0xa8] sm:$0xff] %vm242, 0.0
        %265 = vst.msk [vmem:[#allocation2 + $0xb0] sm:$0xff] %vm242, 0.0
        %266 = vst.msk [vmem:[#allocation2 + $0xb8] sm:$0xff] %vm242, 0.0
        %267 = vst.msk [vmem:[#allocation2 + $0xc0] sm:$0xff] %vm242, 0.0
        %268 = vst.msk [vmem:[#allocation2 + $0xc8] sm:$0xff] %vm242, 0.0
        %269 = vst.msk [vmem:[#allocation2 + $0xd0] sm:$0xff] %vm242, 0.0
        %270 = vst.msk [vmem:[#allocation2 + $0xd8] sm:$0xff] %vm242, 0.0
        %271 = vst.msk [vmem:[#allocation2 + $0xe0] sm:$0xff] %vm242, 0.0
        %272 = vst.msk [vmem:[#allocation2 + $0xe8] sm:$0xff] %vm242, 0.0
        %273 = vst.msk [vmem:[#allocation2 + $0xf0] sm:$0xff] %vm242, 0.0
        %274 = vst.msk [vmem:[#allocation2 + $0xf8] sm:$0xff] %vm242, 0.0
      $region36: #{tpu_custom_call.1} parent=31 // pred_fallthru
        _
      %s275 = smul.u32 %s28, 128
      %s276 = sadd.s32 %s275, 1
      %s277 = sld [smem:[#allocation5 + %s276]]
      %s278 = sadd.s32 %s275, 2
      %s279 = sld [smem:[#allocation5 + %s278]]
      loop: start=0, step=1, limit=16
      $region37: #{tpu_custom_call.1} parent=31 // loop_pre_header
        _
      $region38: #{tpu_custom_call.1} parent=31 // loop_header
        %s281 = sphi 0, %s285
        %p282 = scmp.ge.s32.totalorder %s281, 16
      $region39: #{tpu_custom_call.1} parent=31 // loop_header_branch
        %284 = sbr.rel (%p282) target = $region43
      $region40: #{tpu_custom_call.1} parent=31 // loop_body
        %s286 = sadd.s32 %s277, %s281
        %s287 = smul.u32 %s286, 24
        %s288 = sadd.s32 %s279, %s287
        %s289 = scalar_lea.vmem %s223, %s288
        %v290 = vld [vmem:[%s289] sm:$0xff]
        %v291 = vld [vmem:[%s289 + $0x8] sm:$0xff]
        %v292 = vpack.c.bf16 %v290, %v290
        %v293 = vpack.c.bf16 %v291, %v291
        %s294 = smul.u32 %s281, 16
        %s295 = sshra.s32 %s294, 3
        %s296 = sand.u32 %s294, 7
        %s297 = smul.addr %s295, 4
        %s298 = scalar_lea.vmem [#allocation3], %s297
        %vm299 = vcmask 19456
        %300 = vst.msk [vmem:[%s298] sm:$0xf] %vm299, %v292
        %301 = vst.msk [vmem:[%s298 + $0x4] sm:$0xf] %vm299, %v293
      $region41: #{tpu_custom_call.1} parent=31 // loop_footer
        %s285 = sadd.s32 1, %s281
      $region42: #{tpu_custom_call.1} parent=31 // loop_footer_branch
        %280 = sbr.rel target = $region38
      $region43: #{tpu_custom_call.1} parent=31 // loop_exit
        _
      %v302 = vld [vmem:[#allocation2] sm:$0xff]
      %v303 = vld [vmem:[#allocation2 + $0x8] sm:$0xff]
      %v304 = vld [vmem:[#allocation2 + $0x10] sm:$0xff]
      %v305 = vld [vmem:[#allocation2 + $0x18] sm:$0xff]
      %v306 = vld [vmem:[#allocation2 + $0x20] sm:$0xff]
      %v307 = vld [vmem:[#allocation2 + $0x28] sm:$0xff]
      %v308 = vld [vmem:[#allocation2 + $0x30] sm:$0xff]
      %v309 = vld [vmem:[#allocation2 + $0x38] sm:$0xff]
      %v310 = vld [vmem:[#allocation2 + $0x40] sm:$0xff]
      %v311 = vld [vmem:[#allocation2 + $0x48] sm:$0xff]
      %v312 = vld [vmem:[#allocation2 + $0x50] sm:$0xff]
      %v313 = vld [vmem:[#allocation2 + $0x58] sm:$0xff]
      %v314 = vld [vmem:[#allocation2 + $0x60] sm:$0xff]
      %v315 = vld [vmem:[#allocation2 + $0x68] sm:$0xff]
      %v316 = vld [vmem:[#allocation2 + $0x70] sm:$0xff]
      %v317 = vld [vmem:[#allocation2 + $0x78] sm:$0xff]
      %v318 = vld [vmem:[#allocation2 + $0x80] sm:$0xff]
      %v319 = vld [vmem:[#allocation2 + $0x88] sm:$0xff]
      %v320 = vld [vmem:[#allocation2 + $0x90] sm:$0xff]
      %v321 = vld [vmem:[#allocation2 + $0x98] sm:$0xff]
      %v322 = vld [vmem:[#allocation2 + $0xa0] sm:$0xff]
      %v323 = vld [vmem:[#allocation2 + $0xa8] sm:$0xff]
      %v324 = vld [vmem:[#allocation2 + $0xb0] sm:$0xff]
      %v325 = vld [vmem:[#allocation2 + $0xb8] sm:$0xff]
      %v326 = vld [vmem:[#allocation2 + $0xc0] sm:$0xff]
      %v327 = vld [vmem:[#allocation2 + $0xc8] sm:$0xff]
      %v328 = vld [vmem:[#allocation2 + $0xd0] sm:$0xff]
      %v329 = vld [vmem:[#allocation2 + $0xd8] sm:$0xff]
      %v330 = vld [vmem:[#allocation2 + $0xe0] sm:$0xff]
      %v331 = vld [vmem:[#allocation2 + $0xe8] sm:$0xff]
      %v332 = vld [vmem:[#allocation2 + $0xf0] sm:$0xff]
      %v333 = vld [vmem:[#allocation2 + $0xf8] sm:$0xff]
      %v334 = vld [vmem:[#allocation3] sm:$0xf]
      %v335 = vld [vmem:[#allocation3 + $0x4] sm:$0xf]
      %v336 = vld [vmem:[#allocation3 + $0x8] sm:$0xf]
      %v337 = vld [vmem:[#allocation3 + $0xc] sm:$0xf]
      %v338 = vld [vmem:[#allocation3 + $0x10] sm:$0xf]
      %v339 = vld [vmem:[#allocation3 + $0x14] sm:$0xf]
      %v340 = vld [vmem:[#allocation3 + $0x18] sm:$0xf]
      %v341 = vld [vmem:[#allocation3 + $0x1c] sm:$0xf]
      %v342 = vld [vmem:[#allocation3 + $0x20] sm:$0xf]
      %v343 = vld [vmem:[#allocation3 + $0x24] sm:$0xf]
      %v344 = vld [vmem:[#allocation3 + $0x28] sm:$0xf]
      %v345 = vld [vmem:[#allocation3 + $0x2c] sm:$0xf]
      %v346 = vld [vmem:[#allocation3 + $0x30] sm:$0xf]
      %v347 = vld [vmem:[#allocation3 + $0x34] sm:$0xf]
      %v348 = vld [vmem:[#allocation3 + $0x38] sm:$0xf]
      %v349 = vld [vmem:[#allocation3 + $0x3c] sm:$0xf]
      %v350 = vld [vmem:[#allocation3 + $0x40] sm:$0xf]
      %v351 = vld [vmem:[#allocation3 + $0x44] sm:$0xf]
      %v352 = vld [vmem:[#allocation3 + $0x48] sm:$0xf]
      %v353 = vld [vmem:[#allocation3 + $0x4c] sm:$0xf]
      %v354 = vld [vmem:[#allocation3 + $0x50] sm:$0xf]
      %v355 = vld [vmem:[#allocation3 + $0x54] sm:$0xf]
      %v356 = vld [vmem:[#allocation3 + $0x58] sm:$0xf]
      %v357 = vld [vmem:[#allocation3 + $0x5c] sm:$0xf]
      %v358 = vld [vmem:[#allocation3 + $0x60] sm:$0xf]
      %v359 = vld [vmem:[#allocation3 + $0x64] sm:$0xf]
      %v360 = vld [vmem:[#allocation3 + $0x68] sm:$0xf]
      %v361 = vld [vmem:[#allocation3 + $0x6c] sm:$0xf]
      %v362 = vld [vmem:[#allocation3 + $0x70] sm:$0xf]
      %v363 = vld [vmem:[#allocation3 + $0x74] sm:$0xf]
      %v364 = vld [vmem:[#allocation3 + $0x78] sm:$0xf]
      %v365 = vld [vmem:[#allocation3 + $0x7c] sm:$0xf]
      %v366 = vld [vmem:[%s231] sm:$0x3]
      %v399 = vunpack.c.l.b16 %v334
      %v400 = vunpack.c.l.b16 %v335
      %v401 = vunpack.c.l.b16 %v336
      %v402 = vunpack.c.l.b16 %v337
      %v403 = vunpack.c.l.b16 %v338
      %v404 = vunpack.c.l.b16 %v339
      %v405 = vunpack.c.l.b16 %v340
      %v406 = vunpack.c.l.b16 %v341
      %v407 = vunpack.c.l.b16 %v342
      %v408 = vunpack.c.l.b16 %v343
      %v409 = vunpack.c.l.b16 %v344
      %v410 = vunpack.c.l.b16 %v345
      %v411 = vunpack.c.l.b16 %v346
      %v412 = vunpack.c.l.b16 %v347
      %v413 = vunpack.c.l.b16 %v348
      %v414 = vunpack.c.l.b16 %v349
      %v415 = vunpack.c.l.b16 %v350
      %v416 = vunpack.c.l.b16 %v351
      %v417 = vunpack.c.l.b16 %v352
      %v418 = vunpack.c.l.b16 %v353
      %v419 = vunpack.c.l.b16 %v354
      %v420 = vunpack.c.l.b16 %v355
      %v421 = vunpack.c.l.b16 %v356
      %v422 = vunpack.c.l.b16 %v357
      %v423 = vunpack.c.l.b16 %v358
      %v424 = vunpack.c.l.b16 %v359
      %v425 = vunpack.c.l.b16 %v360
      %v426 = vunpack.c.l.b16 %v361
      %v427 = vunpack.c.l.b16 %v362
      %v428 = vunpack.c.l.b16 %v363
      %v429 = vunpack.c.l.b16 %v364
      %v430 = vunpack.c.l.b16 %v365
      %v431 = vpack.c.b16 %v400, %v399
      %v432 = vpack.c.b16 %v402, %v401
      %v433 = vpack.c.b16 %v404, %v403
      %v434 = vpack.c.b16 %v406, %v405
      %v435 = vpack.c.b16 %v408, %v407
      %v436 = vpack.c.b16 %v410, %v409
      %v437 = vpack.c.b16 %v412, %v411
      %v438 = vpack.c.b16 %v414, %v413
      %v439 = vpack.c.b16 %v416, %v415
      %v440 = vpack.c.b16 %v418, %v417
      %v441 = vpack.c.b16 %v420, %v419
      %v442 = vpack.c.b16 %v422, %v421
      %v443 = vpack.c.b16 %v424, %v423
      %v444 = vpack.c.b16 %v426, %v425
      %v445 = vpack.c.b16 %v428, %v427
      %v446 = vpack.c.b16 %v430, %v429
      %vm447 = vcmask 23552
      %v449 = vsel %vm447, %v431, 0
      %v452 = vsel %vm447, %v432, 0
      %v455 = vsel %vm447, %v433, 0
      %v458 = vsel %vm447, %v434, 0
      %v461 = vsel %vm447, %v435, 0
      %v464 = vsel %vm447, %v436, 0
      %v467 = vsel %vm447, %v437, 0
      %v470 = vsel %vm447, %v438, 0
      %v473 = vsel %vm447, %v439, 0
      %v476 = vsel %vm447, %v440, 0
      %v479 = vsel %vm447, %v441, 0
      %v482 = vsel %vm447, %v442, 0
      %v485 = vsel %vm447, %v443, 0
      %v488 = vsel %vm447, %v444, 0
      %v491 = vsel %vm447, %v445, 0
      %v494 = vsel %vm447, %v446, 0
      %vm496 = vcmask 1040384
      %vm497 = vcmask 1041408
      %v498 = vsel %vm496, 4294967295, 65535
      %v499 = vsel %vm497, %v498, 0
      %v501 = vand.u32 %v366, %v499
      %503 = vmatpush.bf16.msra.mxu0 0
      %504 = vmatpush.bf16.msra.mxu0 0
      %505 = vmatpush.bf16.msra.mxu0 0
      %506 = vmatpush.bf16.msra.mxu0 0
      %507 = vmatpush.bf16.msra.mxu0 0
      %508 = vmatpush.bf16.msra.mxu0 0
      %509 = vmatpush.bf16.msra.mxu0 0
      %510 = vmatpush.bf16.msra.mxu0 %v501
      %511 = vmatmul.bf16.gmra.mxu0 %v449
      %v512 = vpop.f32.mrf.mxu0
      %v513 = vadd.f32 0.0, %v512
      %v514 = vpop.f32.mrf.mxu0
      %v515 = vadd.f32 0.0, %v514
      %516 = vmatmul.bf16.gmra.mxu0 %v452
      %v517 = vpop.f32.mrf.mxu0
      %v518 = vadd.f32 0.0, %v517
      %v519 = vpop.f32.mrf.mxu0
      %v520 = vadd.f32 0.0, %v519
      %521 = vmatmul.bf16.gmra.mxu0 %v455
      %v522 = vpop.f32.mrf.mxu0
      %v523 = vadd.f32 0.0, %v522
      %v524 = vpop.f32.mrf.mxu0
      %v525 = vadd.f32 0.0, %v524
      %526 = vmatmul.bf16.gmra.mxu0 %v458
      %v527 = vpop.f32.mrf.mxu0
      %v528 = vadd.f32 0.0, %v527
      %v529 = vpop.f32.mrf.mxu0
      %v530 = vadd.f32 0.0, %v529
      %531 = vmatmul.bf16.gmra.mxu0 %v461
      %v532 = vpop.f32.mrf.mxu0
      %v533 = vadd.f32 0.0, %v532
      %v534 = vpop.f32.mrf.mxu0
      %v535 = vadd.f32 0.0, %v534
      %536 = vmatmul.bf16.gmra.mxu0 %v464
      %v537 = vpop.f32.mrf.mxu0
      %v538 = vadd.f32 0.0, %v537
      %v539 = vpop.f32.mrf.mxu0
      %v540 = vadd.f32 0.0, %v539
      %541 = vmatmul.bf16.gmra.mxu0 %v467
      %v542 = vpop.f32.mrf.mxu0
      %v543 = vadd.f32 0.0, %v542
      %v544 = vpop.f32.mrf.mxu0
      %v545 = vadd.f32 0.0, %v544
      %546 = vmatmul.bf16.gmra.mxu0 %v470
      %v547 = vpop.f32.mrf.mxu0
      %v548 = vadd.f32 0.0, %v547
      %v549 = vpop.f32.mrf.mxu0
      %v550 = vadd.f32 0.0, %v549
      %551 = vmatmul.bf16.gmra.mxu0 %v473
      %v552 = vpop.f32.mrf.mxu0
      %v553 = vadd.f32 0.0, %v552
      %v554 = vpop.f32.mrf.mxu0
      %v555 = vadd.f32 0.0, %v554
      %556 = vmatmul.bf16.gmra.mxu0 %v476
      %v557 = vpop.f32.mrf.mxu0
      %v558 = vadd.f32 0.0, %v557
      %v559 = vpop.f32.mrf.mxu0
      %v560 = vadd.f32 0.0, %v559
      %561 = vmatmul.bf16.gmra.mxu0 %v479
      %v562 = vpop.f32.mrf.mxu0
      %v563 = vadd.f32 0.0, %v562
      %v564 = vpop.f32.mrf.mxu0
      %v565 = vadd.f32 0.0, %v564
      %566 = vmatmul.bf16.gmra.mxu0 %v482
      %v567 = vpop.f32.mrf.mxu0
      %v568 = vadd.f32 0.0, %v567
      %v569 = vpop.f32.mrf.mxu0
      %v570 = vadd.f32 0.0, %v569
      %571 = vmatmul.bf16.gmra.mxu0 %v485
      %v572 = vpop.f32.mrf.mxu0
      %v573 = vadd.f32 0.0, %v572
      %v574 = vpop.f32.mrf.mxu0
      %v575 = vadd.f32 0.0, %v574
      %576 = vmatmul.bf16.gmra.mxu0 %v488
      %v577 = vpop.f32.mrf.mxu0
      %v578 = vadd.f32 0.0, %v577
      %v579 = vpop.f32.mrf.mxu0
      %v580 = vadd.f32 0.0, %v579
      %581 = vmatmul.bf16.gmra.mxu0 %v491
      %v582 = vpop.f32.mrf.mxu0
      %v583 = vadd.f32 0.0, %v582
      %v584 = vpop.f32.mrf.mxu0
      %v585 = vadd.f32 0.0, %v584
      %586 = vmatmul.bf16.gmra.mxu0 %v494
      %v587 = vpop.f32.mrf.mxu0
      %v588 = vadd.f32 0.0, %v587
      %v589 = vpop.f32.mrf.mxu0
      %v590 = vadd.f32 0.0, %v589
      %591 = vdwg.mxu0
      %v592 = vadd.f32 %v302, %v513
      %v593 = vadd.f32 %v303, %v515
      %v594 = vadd.f32 %v304, %v518
      %v595 = vadd.f32 %v305, %v520
      %v596 = vadd.f32 %v306, %v523
      %v597 = vadd.f32 %v307, %v525
      %v598 = vadd.f32 %v308, %v528
      %v599 = vadd.f32 %v309, %v530
      %v600 = vadd.f32 %v310, %v533
      %v601 = vadd.f32 %v311, %v535
      %v602 = vadd.f32 %v312, %v538
      %v603 = vadd.f32 %v313, %v540
      %v604 = vadd.f32 %v314, %v543
      %v605 = vadd.f32 %v315, %v545
      %v606 = vadd.f32 %v316, %v548
      %v607 = vadd.f32 %v317, %v550
      %v608 = vadd.f32 %v318, %v553
      %v609 = vadd.f32 %v319, %v555
      %v610 = vadd.f32 %v320, %v558
      %v611 = vadd.f32 %v321, %v560
      %v612 = vadd.f32 %v322, %v563
      %v613 = vadd.f32 %v323, %v565
      %v614 = vadd.f32 %v324, %v568
      %v615 = vadd.f32 %v325, %v570
      %v616 = vadd.f32 %v326, %v573
      %v617 = vadd.f32 %v327, %v575
      %v618 = vadd.f32 %v328, %v578
      %v619 = vadd.f32 %v329, %v580
      %v620 = vadd.f32 %v330, %v583
      %v621 = vadd.f32 %v331, %v585
      %v622 = vadd.f32 %v332, %v588
      %v623 = vadd.f32 %v333, %v590
      %vm624 = vcmask 523264
      %625 = vst.msk [vmem:[#allocation2] sm:$0xff] %vm624, %v592
      %626 = vst.msk [vmem:[#allocation2 + $0x8] sm:$0xff] %vm624, %v593
      %627 = vst.msk [vmem:[#allocation2 + $0x10] sm:$0xff] %vm624, %v594
      %628 = vst.msk [vmem:[#allocation2 + $0x18] sm:$0xff] %vm624, %v595
      %629 = vst.msk [vmem:[#allocation2 + $0x20] sm:$0xff] %vm624, %v596
      %630 = vst.msk [vmem:[#allocation2 + $0x28] sm:$0xff] %vm624, %v597
      %631 = vst.msk [vmem:[#allocation2 + $0x30] sm:$0xff] %vm624, %v598
      %632 = vst.msk [vmem:[#allocation2 + $0x38] sm:$0xff] %vm624, %v599
      %633 = vst.msk [vmem:[#allocation2 + $0x40] sm:$0xff] %vm624, %v600
      %634 = vst.msk [vmem:[#allocation2 + $0x48] sm:$0xff] %vm624, %v601
      %635 = vst.msk [vmem:[#allocation2 + $0x50] sm:$0xff] %vm624, %v602
      %636 = vst.msk [vmem:[#allocation2 + $0x58] sm:$0xff] %vm624, %v603
      %637 = vst.msk [vmem:[#allocation2 + $0x60] sm:$0xff] %vm624, %v604
      %638 = vst.msk [vmem:[#allocation2 + $0x68] sm:$0xff] %vm624, %v605
      %639 = vst.msk [vmem:[#allocation2 + $0x70] sm:$0xff] %vm624, %v606
      %640 = vst.msk [vmem:[#allocation2 + $0x78] sm:$0xff] %vm624, %v607
      %641 = vst.msk [vmem:[#allocation2 + $0x80] sm:$0xff] %vm624, %v608
      %642 = vst.msk [vmem:[#allocation2 + $0x88] sm:$0xff] %vm624, %v609
      %643 = vst.msk [vmem:[#allocation2 + $0x90] sm:$0xff] %vm624, %v610
      %644 = vst.msk [vmem:[#allocation2 + $0x98] sm:$0xff] %vm624, %v611
      %645 = vst.msk [vmem:[#allocation2 + $0xa0] sm:$0xff] %vm624, %v612
      %646 = vst.msk [vmem:[#allocation2 + $0xa8] sm:$0xff] %vm624, %v613
      %647 = vst.msk [vmem:[#allocation2 + $0xb0] sm:$0xff] %vm624, %v614
      %648 = vst.msk [vmem:[#allocation2 + $0xb8] sm:$0xff] %vm624, %v615
      %649 = vst.msk [vmem:[#allocation2 + $0xc0] sm:$0xff] %vm624, %v616
      %650 = vst.msk [vmem:[#allocation2 + $0xc8] sm:$0xff] %vm624, %v617
      %651 = vst.msk [vmem:[#allocation2 + $0xd0] sm:$0xff] %vm624, %v618
      %652 = vst.msk [vmem:[#allocation2 + $0xd8] sm:$0xff] %vm624, %v619
      %653 = vst.msk [vmem:[#allocation2 + $0xe0] sm:$0xff] %vm624, %v620
      %654 = vst.msk [vmem:[#allocation2 + $0xe8] sm:$0xff] %vm624, %v621
      %655 = vst.msk [vmem:[#allocation2 + $0xf0] sm:$0xff] %vm624, %v622
      %656 = vst.msk [vmem:[#allocation2 + $0xf8] sm:$0xff] %vm624, %v623
      %p657 = scmp.eq.s32.totalorder %s28, 48
      // Predicated region
      $region44: #{tpu_custom_call.1} parent=31 // pred_check
        %p658 = pneg %p657
      $region45: #{tpu_custom_call.1} parent=31 // pred_check_branch
        %660 = sbr.rel (%p658) target = $region47
      $region46: #{tpu_custom_call.1} parent=31 // pred_region
        %v661 = vld [vmem:[#allocation2] sm:$0xff]
        %v662 = vld [vmem:[#allocation2 + $0x8] sm:$0xff]
        %v663 = vld [vmem:[#allocation2 + $0x10] sm:$0xff]
        %v664 = vld [vmem:[#allocation2 + $0x18] sm:$0xff]
        %v665 = vld [vmem:[#allocation2 + $0x20] sm:$0xff]
        %v666 = vld [vmem:[#allocation2 + $0x28] sm:$0xff]
        %v667 = vld [vmem:[#allocation2 + $0x30] sm:$0xff]
        %v668 = vld [vmem:[#allocation2 + $0x38] sm:$0xff]
        %v669 = vld [vmem:[#allocation2 + $0x40] sm:$0xff]
        %v670 = vld [vmem:[#allocation2 + $0x48] sm:$0xff]
        %v671 = vld [vmem:[#allocation2 + $0x50] sm:$0xff]
        %v672 = vld [vmem:[#allocation2 + $0x58] sm:$0xff]
        %v673 = vld [vmem:[#allocation2 + $0x60] sm:$0xff]
        %v674 = vld [vmem:[#allocation2 + $0x68] sm:$0xff]
        %v675 = vld [vmem:[#allocation2 + $0x70] sm:$0xff]
        %v676 = vld [vmem:[#allocation2 + $0x78] sm:$0xff]
        %v677 = vld [vmem:[#allocation2 + $0x80] sm:$0xff]
        %v678 = vld [vmem:[#allocation2 + $0x88] sm:$0xff]
        %v679 = vld [vmem:[#allocation2 + $0x90] sm:$0xff]
        %v680 = vld [vmem:[#allocation2 + $0x98] sm:$0xff]
        %v681 = vld [vmem:[#allocation2 + $0xa0] sm:$0xff]
        %v682 = vld [vmem:[#allocation2 + $0xa8] sm:$0xff]
        %v683 = vld [vmem:[#allocation2 + $0xb0] sm:$0xff]
        %v684 = vld [vmem:[#allocation2 + $0xb8] sm:$0xff]
        %v685 = vld [vmem:[#allocation2 + $0xc0] sm:$0xff]
        %v686 = vld [vmem:[#allocation2 + $0xc8] sm:$0xff]
        %v687 = vld [vmem:[#allocation2 + $0xd0] sm:$0xff]
        %v688 = vld [vmem:[#allocation2 + $0xd8] sm:$0xff]
        %v689 = vld [vmem:[#allocation2 + $0xe0] sm:$0xff]
        %v690 = vld [vmem:[#allocation2 + $0xe8] sm:$0xff]
        %v691 = vld [vmem:[#allocation2 + $0xf0] sm:$0xff]
        %v692 = vld [vmem:[#allocation2 + $0xf8] sm:$0xff]
        %v693 = vld [vmem:[%s3] sm:$0x1]
        %v695 = vperm.slane %v693, 0
        %v697 = vadd.f32 %v661, %v695
        %v698 = vadd.f32 %v662, %v695
        %v699 = vadd.f32 %v663, %v695
        %v700 = vadd.f32 %v664, %v695
        %v701 = vadd.f32 %v665, %v695
        %v702 = vadd.f32 %v666, %v695
        %v703 = vadd.f32 %v667, %v695
        %v704 = vadd.f32 %v668, %v695
        %v705 = vadd.f32 %v669, %v695
        %v706 = vadd.f32 %v670, %v695
        %v707 = vadd.f32 %v671, %v695
        %v708 = vadd.f32 %v672, %v695
        %v709 = vadd.f32 %v673, %v695
        %v710 = vadd.f32 %v674, %v695
        %v711 = vadd.f32 %v675, %v695
        %v712 = vadd.f32 %v676, %v695
        %v713 = vadd.f32 %v677, %v695
        %v714 = vadd.f32 %v678, %v695
        %v715 = vadd.f32 %v679, %v695
        %v716 = vadd.f32 %v680, %v695
        %v717 = vadd.f32 %v681, %v695
        %v718 = vadd.f32 %v682, %v695
        %v719 = vadd.f32 %v683, %v695
        %v720 = vadd.f32 %v684, %v695
        %v721 = vadd.f32 %v685, %v695
        %v722 = vadd.f32 %v686, %v695
        %v723 = vadd.f32 %v687, %v695
        %v724 = vadd.f32 %v688, %v695
        %v725 = vadd.f32 %v689, %v695
        %v726 = vadd.f32 %v690, %v695
        %v727 = vadd.f32 %v691, %v695
        %v728 = vadd.f32 %v692, %v695
        %729 = vst.msk [vmem:[%s236] sm:$0xff] %vm624, %v697
        %730 = vst.msk [vmem:[%s236 + $0x8] sm:$0xff] %vm624, %v698
        %731 = vst.msk [vmem:[%s236 + $0x10] sm:$0xff] %vm624, %v699
        %732 = vst.msk [vmem:[%s236 + $0x18] sm:$0xff] %vm624, %v700
        %733 = vst.msk [vmem:[%s236 + $0x20] sm:$0xff] %vm624, %v701
        %734 = vst.msk [vmem:[%s236 + $0x28] sm:$0xff] %vm624, %v702
        %735 = vst.msk [vmem:[%s236 + $0x30] sm:$0xff] %vm624, %v703
        %736 = vst.msk [vmem:[%s236 + $0x38] sm:$0xff] %vm624, %v704
        %737 = vst.msk [vmem:[%s236 + $0x40] sm:$0xff] %vm624, %v705
        %738 = vst.msk [vmem:[%s236 + $0x48] sm:$0xff] %vm624, %v706
        %739 = vst.msk [vmem:[%s236 + $0x50] sm:$0xff] %vm624, %v707
        %740 = vst.msk [vmem:[%s236 + $0x58] sm:$0xff] %vm624, %v708
        %741 = vst.msk [vmem:[%s236 + $0x60] sm:$0xff] %vm624, %v709
        %742 = vst.msk [vmem:[%s236 + $0x68] sm:$0xff] %vm624, %v710
        %743 = vst.msk [vmem:[%s236 + $0x70] sm:$0xff] %vm624, %v711
        %744 = vst.msk [vmem:[%s236 + $0x78] sm:$0xff] %vm624, %v712
        %745 = vst.msk [vmem:[%s236 + $0x80] sm:$0xff] %vm624, %v713
        %746 = vst.msk [vmem:[%s236 + $0x88] sm:$0xff] %vm624, %v714
        %747 = vst.msk [vmem:[%s236 + $0x90] sm:$0xff] %vm624, %v715
        %748 = vst.msk [vmem:[%s236 + $0x98] sm:$0xff] %vm624, %v716
        %749 = vst.msk [vmem:[%s236 + $0xa0] sm:$0xff] %vm624, %v717
        %750 = vst.msk [vmem:[%s236 + $0xa8] sm:$0xff] %vm624, %v718
        %751 = vst.msk [vmem:[%s236 + $0xb0] sm:$0xff] %vm624, %v719
        %752 = vst.msk [vmem:[%s236 + $0xb8] sm:$0xff] %vm624, %v720
        %753 = vst.msk [vmem:[%s236 + $0xc0] sm:$0xff] %vm624, %v721
        %754 = vst.msk [vmem:[%s236 + $0xc8] sm:$0xff] %vm624, %v722
        %755 = vst.msk [vmem:[%s236 + $0xd0] sm:$0xff] %vm624, %v723
        %756 = vst.msk [vmem:[%s236 + $0xd8] sm:$0xff] %vm624, %v724
        %757 = vst.msk [vmem:[%s236 + $0xe0] sm:$0xff] %vm624, %v725
        %758 = vst.msk [vmem:[%s236 + $0xe8] sm:$0xff] %vm624, %v726
        %759 = vst.msk [vmem:[%s236 + $0xf0] sm:$0xff] %vm624, %v727
        %760 = vst.msk [vmem:[%s236 + $0xf8] sm:$0xff] %vm624, %v728
      $region47: #{tpu_custom_call.1} parent=31 // pred_fallthru
        _
      %p761 = scmp.lt.s32.totalorder %s27, 1
      %s762 = scalar_select %p761, %s27, 1
      %s763 = smul.addr %s762, 32
      %s764 = smul.addr %s763, 8
      %s765 = scalar_lea.vmem %s4, %s764
      // Predicated region
      $region48: #{tpu_custom_call.1} parent=31 // pred_check
        %p766 = pneg %p134
      $region49: #{tpu_custom_call.1} parent=31 // pred_check_branch
        %768 = sbr.rel (%p766) target = $region51
      $region50: #{tpu_custom_call.1} parent=31 // pred_region
        _
      $region51: #{tpu_custom_call.1} parent=31 // pred_fallthru
        _
    $region32: #{tpu_custom_call.1} parent=5 // pred_fallthru
      _
    %p769 = scmp.le.s32.totalorder 2, %s18
    // Predicated region
    $region52: #{tpu_custom_call.1} parent=5 // pred_check
      %p770 = pneg %p769
    $region53: #{tpu_custom_call.1} parent=5 // pred_check_branch
      %772 = sbr.rel (%p770) target = $region55
    $region54: #{tpu_custom_call.1} parent=5 // pred_region
      %s773 = ssub.s32 %s18, 2
      // Predicated region
      $region56: #{tpu_custom_call.1} parent=54 // pred_check
        %p774 = pneg %p140
      $region57: #{tpu_custom_call.1} parent=54 // pred_check_branch
        %776 = sbr.rel (%p774) target = $region59
      $region58: #{tpu_custom_call.1} parent=54 // pred_region
        %p777 = scmp.lt.s32.totalorder %s29, 1
        %s778 = scalar_select %p777, %s29, 1
        %s779 = smul.addr %s778, 32
        %s780 = smul.addr %s779, 8
        %s781 = scalar_lea.vmem %s4, %s780
      $region59: #{tpu_custom_call.1} parent=54 // pred_fallthru
        _
    $region55: #{tpu_custom_call.1} parent=5 // pred_fallthru
      _
  $region6: #{tpu_custom_call.1} parent=0 // loop_footer
    %s22 = sadd.s32 1, %s18
  $region7: #{tpu_custom_call.1} parent=0 // loop_footer_branch
    %17 = sbr.rel target = $region3
  $region8: #{tpu_custom_call.1} parent=0 // loop_exit
    _

</llo_original>
